<compile_context>
chip_gen: v7x
topology: tpu7x:2x2x1
jax: 0.10.0
libtpu: 0.0.40
codegen_flags: <defaults>
</compile_context>

<pallas_src>
import math

import jax
import jax.numpy as jnp
from jax.experimental import pallas as pl
from jax.experimental.pallas import tpu as pltpu

EPS = 1e-6
_VMEM_LIMIT_BYTES = 32 * 1024 * 1024    # scoped limit requested from Mosaic
_VMEM_BUDGET_BYTES = 24 * 1024 * 1024   # target working set (~75% of the limit)


def _pick_block_rows(rows, per_row_bytes, sublane):
    """Largest row tile that fits the VMEM budget, divides `rows`, and is a
    multiple of the sublane packing (or spans the whole row axis)."""
    max_rows = max(sublane, _VMEM_BUDGET_BYTES // per_row_bytes)
    if rows <= max_rows:
        return rows
    b = (max_rows // sublane) * sublane
    while b >= sublane:
        if rows % b == 0:
            return b
        b -= sublane
    return rows  # pathological row count: fall back to one block (no padding)


def fused_qknorm_rope(q, k, pe, q_scale, k_scale, *, eps=EPS):
    """RMSNorm(q), RMSNorm(k) over head_dim, mutual dtype cast, and flux-style
    RoPE (apply_rope) in a single Pallas pass.

    q, k:      [B, H, L, D]
    pe:        [..., L, D//2, 2, 2] with all leading dims == 1
    q_scale,
    k_scale:   [D]
    Returns (q_rope, k_rope) with q_rope.dtype == k.dtype and
    k_rope.dtype == q.dtype (QKNorm's mutual cast, folded into the store).
    """
    assert q.shape == k.shape, "q and k must have the same shape"
    B, H, L, D = q.shape
    assert D % 2 == 0, "head_dim must be even for RoPE"
    P = D // 2
    assert pe.shape[-4:] == (L, P, 2, 2), "pe must be [..., L, D//2, 2, 2]"
    assert all(s == 1 for s in pe.shape[:-4]), (
        "fused kernel assumes pe broadcasts over batch and heads")
    # TODO(synk): per-batch rope tables (pe leading dim > 1) would need a
    # batch-indexed coefficient BlockSpec; chroma/flux use a broadcastable pe.

    # apply_rope elementwise over the last dim (p = d // 2):
    #   out[2p]   = F[p,0,0]*x[2p] + F[p,0,1]*x[2p+1]
    #   out[2p+1] = F[p,1,0]*x[2p] + F[p,1,1]*x[2p+1]
    # With y the normed value and lane rolls by +1 / -1:
    #   out = c1*y + c2*roll(y, +1) + c3*roll(y, -1)
    # c2/c3 are exactly 0 at pair (and fold-chunk) boundaries, so the cyclic
    # roll never leaks data across positions.
    pe_f = pe.reshape(L, P, 2, 2).astype(jnp.float32)
    a = pe_f[..., 0].reshape(L, D)   # multiplies the even element of each pair
    b = pe_f[..., 1].reshape(L, D)   # multiplies the odd element of each pair
    even = (jnp.arange(D) % 2) == 0
    c1 = jnp.where(even, a, b)
    c2 = jnp.where(even, 0.0, a)
    c3 = jnp.where(even, b, 0.0)

    # Lane-dense fold: pack g = 128 // D sequence positions into the lane axis.
    if D < 128 and 128 % D == 0 and L % (128 // D) == 0:
        g = 128 // D
    else:
        g = 1
    W = g * D
    rows = L // g
    BH = B * H

    q3 = q.reshape(BH, rows, W)
    k3 = k.reshape(BH, rows, W)
    c1 = c1.reshape(rows, W)
    c2 = c2.reshape(rows, W)
    c3 = c3.reshape(rows, W)
    qs = jnp.tile(q_scale.astype(jnp.float32).reshape(1, D), (1, g))  # (1, W)
    ks = jnp.tile(k_scale.astype(jnp.float32).reshape(1, D), (1, g))  # (1, W)

    # VMEM per grid step (double-buffered): q/k in + q/k out + 3 f32 coeff tiles.
    sublane = max(8, 32 // min(q.dtype.itemsize, k.dtype.itemsize))
    per_row_bytes = 2 * W * (2 * q.dtype.itemsize + 2 * k.dtype.itemsize + 3 * 4)
    R = _pick_block_rows(rows, per_row_bytes, sublane)
    n_tiles = rows // R

    qk_block = (1, R, W)
    qk_map = lambda i, bh: (bh, i, 0)
    c_map = lambda i, bh: (i, 0)
    s_map = lambda i, bh: (0, 0)

    def kernel(q_ref, k_ref, c1_ref, c2_ref, c3_ref, qs_ref, ks_ref,
               qo_ref, ko_ref):
        cc1 = c1_ref[...]
        cc2 = c2_ref[...]
        cc3 = c3_ref[...]
        sq = qs_ref[...]   # (1, W) f32 -- broadcast hoisted out of norm_rope
        sk = ks_ref[...]

        def norm_rope(x_ref, scale, o_ref):
            # RMSNorm over head_dim inside the lane-dense fold.
            x = x_ref[...].astype(jnp.float32).reshape(R, g, D)
            inv = jax.lax.rsqrt(jnp.mean(x * x, axis=-1, keepdims=True) + eps)
            y = (x * inv).reshape(R, W) * scale
            # RoPE pair mixing via lane rolls (XLU) + precomputed coefficients.
            out = cc1 * y
            out = out + cc2 * pltpu.roll(y, 1, axis=1)
            out = out + cc3 * pltpu.roll(y, W - 1, axis=1)
            o_ref[...] = out.reshape(1, R, W).astype(o_ref.dtype)

        norm_rope(q_ref, sq, qo_ref)
        norm_rope(k_ref, sk, ko_ref)

    qo, ko = pl.pallas_call(
        kernel,
        out_shape=(
            jax.ShapeDtypeStruct((BH, rows, W), k.dtype),  # q.to(k) at store
            jax.ShapeDtypeStruct((BH, rows, W), q.dtype),  # k.to(q) at store
        ),
        grid_spec=pltpu.PrefetchScalarGridSpec(
            num_scalar_prefetch=0,
            grid=(n_tiles, BH),  # bh innermost -> rope coeff tiles are revisited
            in_specs=[
                pl.BlockSpec(qk_block, qk_map),
                pl.BlockSpec(qk_block, qk_map),
                pl.BlockSpec((R, W), c_map),
                pl.BlockSpec((R, W), c_map),
                pl.BlockSpec((R, W), c_map),
                pl.BlockSpec((1, W), s_map),
                pl.BlockSpec((1, W), s_map),
            ],
            out_specs=[
                pl.BlockSpec(qk_block, qk_map),
                pl.BlockSpec(qk_block, qk_map),
            ],
        ),
        compiler_params=pltpu.CompilerParams(
            dimension_semantics=("parallel", "parallel"),
            vmem_limit_bytes=_VMEM_LIMIT_BYTES,
        ),
    )(q3, k3, c1, c2, c3, qs, ks)

    return qo.reshape(B, H, L, D), ko.reshape(B, H, L, D)


# ----------------------------------------------------------------------------
# SelfAttention forward (qkv linear -> QKNorm -> RoPE -> SDPA -> proj).
# ----------------------------------------------------------------------------

def _linear(x, w, b=None):
    y = jnp.einsum("...i,oi->...o", x, w, precision=jax.lax.Precision.HIGHEST)
    if b is not None:
        y = y + b
    return y


def _sdpa(q, k, v):
    """scaled_dot_product_attention over [B, H, L, D] -> [B, L, H*D]."""
    B, H, L, D = q.shape
    qf, kf, vf = (t.astype(jnp.float32) for t in (q, k, v))
    logits = jnp.einsum("bhqd,bhkd->bhqk", qf, kf,
                        precision=jax.lax.Precision.HIGHEST) / math.sqrt(D)
    probs = jax.nn.softmax(logits, axis=-1)
    out = jnp.einsum("bhqk,bhkd->bhqd", probs, vf,
                     precision=jax.lax.Precision.HIGHEST)
    # TODO(synk): attention core left to XLA; a Pallas flash-attention kernel
    # could be fused with the QKNorm+RoPE outputs.
    return out.transpose(0, 2, 1, 3).reshape(B, L, H * D).astype(v.dtype)


def _rms_norm_ref(x, scale, eps=EPS):
    x32 = x.astype(jnp.float32)
    inv = jax.lax.rsqrt(jnp.mean(x32 * x32, axis=-1, keepdims=True) + eps)
    return (x32 * inv * scale.astype(jnp.float32)).astype(x.dtype)


def _apply_rope_ref(xq, xk, freqs_cis):
    xq_ = xq.astype(jnp.float32).reshape(*xq.shape[:-1], -1, 1, 2)
    xk_ = xk.astype(jnp.float32).reshape(*xk.shape[:-1], -1, 1, 2)
    xq_out = freqs_cis[..., 0] * xq_[..., 0] + freqs_cis[..., 1] * xq_[..., 1]
    xk_out = freqs_cis[..., 0] * xk_[..., 0] + freqs_cis[..., 1] * xk_[..., 1]
    return (xq_out.reshape(xq.shape).astype(xq.dtype),
            xk_out.reshape(xk.shape).astype(xk.dtype))


def _qknorm_rope_ref(q, k, pe, q_scale, k_scale):
    qn = _rms_norm_ref(q, q_scale)
    kn = _rms_norm_ref(k, k_scale)
    qn, kn = qn.astype(k.dtype), kn.astype(q.dtype)   # QKNorm mutual cast
    return _apply_rope_ref(qn, kn, pe)


def self_attention_forward(x, pe, params, num_heads, *, use_pallas=True):
    qkv = _linear(x, params["w_qkv"], params.get("b_qkv"))
    B, L, _ = qkv.shape
    H = num_heads
    D = qkv.shape[-1] // (3 * H)
    qkv = qkv.reshape(B, L, 3, H, D).transpose(2, 0, 3, 1, 4)
    q, k, v = qkv[0], qkv[1], qkv[2]
    if use_pallas:
        q, k = fused_qknorm_rope(q, k, pe, params["q_scale"], params["k_scale"])
    else:
        q, k = _qknorm_rope_ref(q, k, pe, params["q_scale"], params["k_scale"])
    x_attn = _sdpa(q, k, v)
    return _linear(x_attn, params["w_proj"], params["b_proj"])


def _rope_pe(L, D, theta=10000.0):
    """Flux/chroma-style rope table: [1, 1, L, D//2, 2, 2]."""
    pos = jnp.arange(L, dtype=jnp.float32)
    scale = jnp.arange(0, D, 2, dtype=jnp.float32) / D
    omega = 1.0 / (theta ** scale)
    ang = pos[:, None] * omega[None, :]
    cos, sin = jnp.cos(ang), jnp.sin(ang)
    pe = jnp.stack([cos, -sin, sin, cos], axis=-1).reshape(L, D // 2, 2, 2)
    return pe[None, None]


if __name__ == "__main__":
    # SelfAttention(dim=256, num_heads=8) -> head_dim=32 (< 128, so the
    # lane-dense fold g=4 path is exercised), B=2, L=32.
    B, L, dim, H = 2, 32, 256, 8
    D = dim // H

    key = jax.random.PRNGKey(0)
    kx, kw1, kw2, kb2, ksq, ksk = jax.random.split(key, 6)
    x = jax.random.normal(kx, (B, L, dim), jnp.float32)
    params = dict(
        w_qkv=0.02 * jax.random.normal(kw1, (3 * dim, dim), jnp.float32),
        b_qkv=None,  # qkv_bias=False (module default)
        q_scale=jnp.ones((D,), jnp.float32) + 0.01 * jax.random.normal(ksq, (D,)),
        k_scale=jnp.ones((D,), jnp.float32) + 0.01 * jax.random.normal(ksk, (D,)),
        w_proj=0.02 * jax.random.normal(kw2, (dim, dim), jnp.float32),
        b_proj=0.01 * jax.random.normal(kb2, (dim,), jnp.float32),
    )
    pe = _rope_pe(L, D)

    # Pallas-accelerated forward.
    out = self_attention_forward(x, pe, params, H, use_pallas=True)
    jax.block_until_ready(out)

    # Kernel-level check: fused QKNorm+RoPE vs. the pure-jnp mirror of torch.
    qkv = _linear(x, params["w_qkv"], params["b_qkv"])
    qkv = qkv.reshape(B, L, 3, H, D).transpose(2, 0, 3, 1, 4)
    q, k, v = qkv[0], qkv[1], qkv[2]
    q_p, k_p = fused_qknorm_rope(q, k, pe, params["q_scale"], params["k_scale"])
    q_r, k_r = _qknorm_rope_ref(q, k, pe, params["q_scale"], params["k_scale"])
    assert q_p.shape == q.shape and k_p.shape == k.shape
    assert jnp.allclose(q_p, q_r, atol=1e-5, rtol=1e-5), \
        float(jnp.max(jnp.abs(q_p - q_r)))
    assert jnp.allclose(k_p, k_r, atol=1e-5, rtol=1e-5), \
        float(jnp.max(jnp.abs(k_p - k_r)))

    # End-to-end check against the pure-jnp reference forward.
    out_ref = self_attention_forward(x, pe, params, H, use_pallas=False)
    assert out.shape == (B, L, dim)
    assert jnp.allclose(out, out_ref, atol=1e-3, rtol=1e-3), \
        float(jnp.max(jnp.abs(out - out_ref)))

    print("KERNEL_OK")
</pallas_src>

<mosaic_0001>
module attributes {stable_mosaic.version = 11 : i64} {
  func.func @kernel(%arg0: i32, %arg1: i32, %arg2: memref<1x8x128xf32, #tpu.memory_space<vmem>>, %arg3: memref<1x8x128xf32, #tpu.memory_space<vmem>>, %arg4: memref<8x128xf32, #tpu.memory_space<vmem>>, %arg5: memref<8x128xf32, #tpu.memory_space<vmem>>, %arg6: memref<8x128xf32, #tpu.memory_space<vmem>>, %arg7: memref<1x128xf32, #tpu.memory_space<vmem>>, %arg8: memref<1x128xf32, #tpu.memory_space<vmem>>, %arg9: memref<1x8x128xf32, #tpu.memory_space<vmem>>, %arg10: memref<1x8x128xf32, #tpu.memory_space<vmem>>) attributes {dimension_semantics = [#tpu.dimension_semantics<parallel>, #tpu.dimension_semantics<parallel>], iteration_bounds = array<i64: 1, 16>, scalar_prefetch = 0 : i64, scratch_operands = 0 : i64, tpu.core_type = #tpu.core_type<tc>, window_params = [{transform_indices = @transform_0, window_bounds = array<i64: 1, 8, 128>}, {transform_indices = @transform_1, window_bounds = array<i64: 1, 8, 128>}, {transform_indices = @transform_2, window_bounds = array<i64: 8, 128>}, {transform_indices = @transform_3, window_bounds = array<i64: 8, 128>}, {transform_indices = @transform_4, window_bounds = array<i64: 8, 128>}, {pipeline_mode = #tpu.pipeline_mode<synchronous>, transform_indices = @transform_5, window_bounds = array<i64: 1, 128>}, {pipeline_mode = #tpu.pipeline_mode<synchronous>, transform_indices = @transform_6, window_bounds = array<i64: 1, 128>}, {transform_indices = @transform_7, window_bounds = array<i64: 1, 8, 128>}, {transform_indices = @transform_8, window_bounds = array<i64: 1, 8, 128>}]} {
    %c0 = arith.constant 0 : index
    %c0_0 = arith.constant 0 : index
    %0 = vector.load %arg4[%c0, %c0_0] : memref<8x128xf32, #tpu.memory_space<vmem>>, vector<8x128xf32>
    %c0_1 = arith.constant 0 : index
    %c0_2 = arith.constant 0 : index
    %1 = vector.load %arg5[%c0_1, %c0_2] : memref<8x128xf32, #tpu.memory_space<vmem>>, vector<8x128xf32>
    %c0_3 = arith.constant 0 : index
    %c0_4 = arith.constant 0 : index
    %2 = vector.load %arg6[%c0_3, %c0_4] : memref<8x128xf32, #tpu.memory_space<vmem>>, vector<8x128xf32>
    %c0_5 = arith.constant 0 : index
    %c0_6 = arith.constant 0 : index
    %3 = vector.load %arg7[%c0_5, %c0_6] : memref<1x128xf32, #tpu.memory_space<vmem>>, vector<1x128xf32>
    %c0_7 = arith.constant 0 : index
    %c0_8 = arith.constant 0 : index
    %4 = vector.load %arg8[%c0_7, %c0_8] : memref<1x128xf32, #tpu.memory_space<vmem>>, vector<1x128xf32>
    %c0_9 = arith.constant 0 : index
    %c0_10 = arith.constant 0 : index
    %c0_11 = arith.constant 0 : index
    %5 = vector.load %arg2[%c0_9, %c0_10, %c0_11] : memref<1x8x128xf32, #tpu.memory_space<vmem>>, vector<1x8x128xf32>
    %6 = vector.shape_cast %5 : vector<1x8x128xf32> to vector<8x4x32xf32>
    %7 = arith.mulf %6, %6 : vector<8x4x32xf32>
    %cst = arith.constant dense<0.000000e+00> : vector<8x4xf32>
    %8 = vector.multi_reduction <add>, %7, %cst [2] : vector<8x4x32xf32> to vector<8x4xf32>
    %9 = vector.shape_cast %8 : vector<8x4xf32> to vector<8x4x1xf32>
    %cst_12 = arith.constant 3.200000e+01 : f32
    %10 = vector.broadcast %cst_12 : f32 to vector<8x4x1xf32>
    %11 = arith.divf %9, %10 : vector<8x4x1xf32>
    %cst_13 = arith.constant 9.99999997E-7 : f32
    %12 = vector.broadcast %cst_13 : f32 to vector<8x4x1xf32>
    %13 = arith.addf %11, %12 : vector<8x4x1xf32>
    %14 = math.rsqrt %13 : vector<8x4x1xf32>
    %15 = vector.broadcast %14 : vector<8x4x1xf32> to vector<8x4x32xf32>
    %16 = arith.mulf %6, %15 : vector<8x4x32xf32>
    %17 = vector.shape_cast %16 : vector<8x4x32xf32> to vector<8x128xf32>
    %18 = vector.broadcast %3 : vector<1x128xf32> to vector<8x128xf32>
    %19 = arith.mulf %17, %18 : vector<8x128xf32>
    %20 = arith.mulf %0, %19 : vector<8x128xf32>
    %c1_i32 = arith.constant 1 : i32
    %21 = tpu.dynamic_rotate %19 by %c1_i32 dim 1 : vector<8x128xf32>, i32 -> vector<8x128xf32>
    %22 = arith.mulf %1, %21 : vector<8x128xf32>
    %23 = arith.addf %20, %22 : vector<8x128xf32>
    %c127_i32 = arith.constant 127 : i32
    %24 = tpu.dynamic_rotate %19 by %c127_i32 dim 1 : vector<8x128xf32>, i32 -> vector<8x128xf32>
    %25 = arith.mulf %2, %24 : vector<8x128xf32>
    %26 = arith.addf %23, %25 : vector<8x128xf32>
    %27 = vector.shape_cast %26 : vector<8x128xf32> to vector<1x8x128xf32>
    %c0_14 = arith.constant 0 : index
    %c0_15 = arith.constant 0 : index
    %c0_16 = arith.constant 0 : index
    %28 = vector.load %arg9[%c0_14, %c0_15, %c0_16] : memref<1x8x128xf32, #tpu.memory_space<vmem>>, vector<1x8x128xf32>
    tpu.vector_store %arg9[%c0_14, %c0_15, %c0_16], %27 {strides = array<i32>} : memref<1x8x128xf32, #tpu.memory_space<vmem>>, vector<1x8x128xf32>,
    %c0_17 = arith.constant 0 : index
    %c0_18 = arith.constant 0 : index
    %c0_19 = arith.constant 0 : index
    %29 = vector.load %arg3[%c0_17, %c0_18, %c0_19] : memref<1x8x128xf32, #tpu.memory_space<vmem>>, vector<1x8x128xf32>
    %30 = vector.shape_cast %29 : vector<1x8x128xf32> to vector<8x4x32xf32>
    %31 = arith.mulf %30, %30 : vector<8x4x32xf32>
    %cst_20 = arith.constant dense<0.000000e+00> : vector<8x4xf32>
    %32 = vector.multi_reduction <add>, %31, %cst_20 [2] : vector<8x4x32xf32> to vector<8x4xf32>
    %33 = vector.shape_cast %32 : vector<8x4xf32> to vector<8x4x1xf32>
    %cst_21 = arith.constant 3.200000e+01 : f32
    %34 = vector.broadcast %cst_21 : f32 to vector<8x4x1xf32>
    %35 = arith.divf %33, %34 : vector<8x4x1xf32>
    %cst_22 = arith.constant 9.99999997E-7 : f32
    %36 = vector.broadcast %cst_22 : f32 to vector<8x4x1xf32>
    %37 = arith.addf %35, %36 : vector<8x4x1xf32>
    %38 = math.rsqrt %37 : vector<8x4x1xf32>
    %39 = vector.broadcast %38 : vector<8x4x1xf32> to vector<8x4x32xf32>
    %40 = arith.mulf %30, %39 : vector<8x4x32xf32>
    %41 = vector.shape_cast %40 : vector<8x4x32xf32> to vector<8x128xf32>
    %42 = vector.broadcast %4 : vector<1x128xf32> to vector<8x128xf32>
    %43 = arith.mulf %41, %42 : vector<8x128xf32>
    %44 = arith.mulf %0, %43 : vector<8x128xf32>
    %c1_i32_23 = arith.constant 1 : i32
    %45 = tpu.dynamic_rotate %43 by %c1_i32_23 dim 1 : vector<8x128xf32>, i32 -> vector<8x128xf32>
    %46 = arith.mulf %1, %45 : vector<8x128xf32>
    %47 = arith.addf %44, %46 : vector<8x128xf32>
    %c127_i32_24 = arith.constant 127 : i32
    %48 = tpu.dynamic_rotate %43 by %c127_i32_24 dim 1 : vector<8x128xf32>, i32 -> vector<8x128xf32>
    %49 = arith.mulf %2, %48 : vector<8x128xf32>
    %50 = arith.addf %47, %49 : vector<8x128xf32>
    %51 = vector.shape_cast %50 : vector<8x128xf32> to vector<1x8x128xf32>
    %c0_25 = arith.constant 0 : index
    %c0_26 = arith.constant 0 : index
    %c0_27 = arith.constant 0 : index
    %52 = vector.load %arg10[%c0_25, %c0_26, %c0_27] : memref<1x8x128xf32, #tpu.memory_space<vmem>>, vector<1x8x128xf32>
    tpu.vector_store %arg10[%c0_25, %c0_26, %c0_27], %51 {strides = array<i32>} : memref<1x8x128xf32, #tpu.memory_space<vmem>>, vector<1x8x128xf32>,
    return
  }
  func.func @transform_0(%arg0: i32, %arg1: i32) -> (i32, i32, i32) {
    %c0_i32 = arith.constant 0 : i32
    %c0_i32_0 = arith.constant 0 : i32
    return %arg1, %arg0, %c0_i32 : i32, i32, i32
  }
  func.func @transform_1(%arg0: i32, %arg1: i32) -> (i32, i32, i32) {
    %c0_i32 = arith.constant 0 : i32
    %c0_i32_0 = arith.constant 0 : i32
    return %arg1, %arg0, %c0_i32 : i32, i32, i32
  }
  func.func @transform_2(%arg0: i32, %arg1: i32) -> (i32, i32) {
    %c0_i32 = arith.constant 0 : i32
    %c0_i32_0 = arith.constant 0 : i32
    return %arg0, %c0_i32 : i32, i32
  }
  func.func @transform_3(%arg0: i32, %arg1: i32) -> (i32, i32) {
    %c0_i32 = arith.constant 0 : i32
    %c0_i32_0 = arith.constant 0 : i32
    return %arg0, %c0_i32 : i32, i32
  }
  func.func @transform_4(%arg0: i32, %arg1: i32) -> (i32, i32) {
    %c0_i32 = arith.constant 0 : i32
    %c0_i32_0 = arith.constant 0 : i32
    return %arg0, %c0_i32 : i32, i32
  }
  func.func @transform_5(%arg0: i32, %arg1: i32) -> (i32, i32) {
    %c0_i32 = arith.constant 0 : i32
    %c0_i32_0 = arith.constant 0 : i32
    %c0_i32_1 = arith.constant 0 : i32
    return %c0_i32, %c0_i32_0 : i32, i32
  }
  func.func @transform_6(%arg0: i32, %arg1: i32) -> (i32, i32) {
    %c0_i32 = arith.constant 0 : i32
    %c0_i32_0 = arith.constant 0 : i32
    %c0_i32_1 = arith.constant 0 : i32
    return %c0_i32, %c0_i32_0 : i32, i32
  }
  func.func @transform_7(%arg0: i32, %arg1: i32) -> (i32, i32, i32) {
    %c0_i32 = arith.constant 0 : i32
    %c0_i32_0 = arith.constant 0 : i32
    return %arg1, %arg0, %c0_i32 : i32, i32, i32
  }
  func.func @transform_8(%arg0: i32, %arg1: i32) -> (i32, i32, i32) {
    %c0_i32 = arith.constant 0 : i32
    %c0_i32_0 = arith.constant 0 : i32
    return %arg1, %arg0, %c0_i32 : i32, i32, i32
  }
}

</mosaic_0001>

<llo_original>
// kernel: tpu_custom_call.1
$region0: #{tpu_custom_call.1}
  #allocation0 [shape = 'u32[]', space=smem, size = 0x4, offset = 0x4, fixed_abs, tag = 'smem constant byte address 0x4 - core index']
  #allocation1 [shape = 'u32[144,128]{1,0:T(1,128)}', space=vmem, size = 0x12000, scoped, tag = 'internal scratch']
  %s0 = inlined_call_operand.hbm [shape: f32[16,8,128], index: 0, kind: input, shape index: {}]
  %s1 = inlined_call_operand.hbm [shape: f32[16,8,128], index: 1, kind: input, shape index: {}]
  %s2 = inlined_call_operand.hbm [shape: f32[8,128], index: 2, kind: input, shape index: {}]
  %s3 = inlined_call_operand.vmem [shape: f32[8,128], index: 3, kind: input, shape index: {}]
  %s4 = inlined_call_operand.hbm [shape: f32[8,128], index: 4, kind: input, shape index: {}]
  %s5 = inlined_call_operand.vmem [shape: f32[1,128], index: 5, kind: input, shape index: {}]
  %s6 = inlined_call_operand.vmem [shape: f32[1,128], index: 6, kind: input, shape index: {}]
  %s7 = inlined_call_operand.hbm [shape: f32[16,8,128], index: 7, kind: output, shape index: {0}]
  %s8 = inlined_call_operand.hbm [shape: f32[16,8,128], index: 8, kind: output, shape index: {1}]
  %9 = xla_tuple %s7, %s8
  %s10 = sld [smem:[#allocation0]]
  $region85: #{tpu_custom_call.1} parent=0
    _
  %s12 = ssub.s32 1, %s10
  %s13 = scalar_select 0, %s12, %s10
  $region1: #{tpu_custom_call.1} parent=0
    #allocation2 [shape = 'u8[8192]{0}', space=vmem, size = 0x2000, scoped, tag = 'input window, operand 0']
    #allocation3 [shape = 's32[2]{0}', space=sflag, size = 0x8, scoped, tag = 'scoped memory for tpu_custom_call.1']
    #allocation4 [shape = 's32[2]{0}', space=sflag, size = 0x8, scoped, tag = 'scoped memory for tpu_custom_call.1']
    #allocation5 [shape = 'u8[8192]{0}', space=vmem, size = 0x2000, scoped, tag = 'input window, operand 1']
    #allocation6 [shape = 's32[2]{0}', space=sflag, size = 0x8, scoped, tag = 'scoped memory for tpu_custom_call.1']
    #allocation7 [shape = 'u8[4096]{0}', space=vmem, size = 0x1000, scoped, tag = 'input window, operand 2, single buffered']
    #allocation8 [shape = 'u8[4096]{0}', space=vmem, size = 0x1000, scoped, tag = 'input window, operand 4, single buffered']
    #allocation9 [shape = 's32[1]{0}', space=sflag, size = 0x4, scoped, tag = 'scoped memory for tpu_custom_call.1']
    #allocation10 [shape = 'u8[8192]{0}', space=vmem, size = 0x2000, scoped, tag = 'output window, operand 0']
    #allocation11 [shape = 'u8[8192]{0}', space=vmem, size = 0x2000, scoped, tag = 'output window, operand 1']
    #allocation12 [shape = 's32[2]{0}', space=sflag, size = 0x8, scoped, tag = 'scoped memory for tpu_custom_call.1']
    %14 = vsyncpa [#allocation3], 0
    %s15 = scalar_lea.sflag [#allocation3], 1
    %16 = vsyncpa %s15, 0
    %17 = vsyncpa [#allocation6], 0
    %s18 = scalar_lea.sflag [#allocation6], 1
    %19 = vsyncpa %s18, 0
    %20 = vsyncpa [#allocation9], 0
    %21 = vsyncpa [#allocation4], 0
    %s22 = scalar_lea.sflag [#allocation4], 1
    %23 = vsyncpa %s22, 0
    %24 = vsyncpa [#allocation12], 0
    %s25 = scalar_lea.sflag [#allocation12], 1
    %26 = vsyncpa %s25, 0
    loop: start=0, step=1, limit=18
    $region2: #{tpu_custom_call.1} parent=1 // loop_pre_header
      _
    $region3: #{tpu_custom_call.1} parent=1 // loop_header
      %s28 = sphi 0, %s32
      %p29 = scmp.ge.s32.totalorder %s28, 18
      %s35 = sphi 0, %s47
      %s36 = sphi 0, %s43
      %s37 = sphi 0, %s35
      %s38 = sphi 0, %s36
      %s39 = sphi 0, %s37
      %s40 = sphi 0, %s38
      %s52 = sphi 0, %s54
      %s55 = sphi 0, %s52
      %s56 = sphi 0, %s55
      %s72 = sphi 0, %s56
      %s80 = sphi 0, %s82
      %s83 = sphi 0, %s80
      %s84 = sphi 0, %s83
      %s100 = sphi 0, %s84
      %s106 = sphi 0, %s108
      %s109 = sphi 0, %s106
      %s110 = sphi 0, %s109
      %s126 = sphi 0, %s110
      %s132 = sphi 0, %s134
      %s135 = sphi 0, %s132
      %s136 = sphi 0, %s135
      %s152 = sphi 0, %s136
      %s158 = sphi 0, %s160
      %s161 = sphi 0, %s158
      %s162 = sphi 0, %s161
      %s178 = sphi 0, %s162
      %s182 = sphi 0, %s182
      %s184 = sphi 0, %s182
      %s185 = sphi 0, %s184
      %s199 = sphi 0, %s185
      %s203 = sphi 0, %s203
      %s205 = sphi 0, %s203
      %s206 = sphi 0, %s205
      %s220 = sphi 0, %s206
      %s228 = sphi 0, %s230
      %s231 = sphi 0, %s228
      %s232 = sphi 0, %s231
      %s248 = sphi 0, %s232
      %s256 = sphi 0, %s258
      %s259 = sphi 0, %s256
      %s260 = sphi 0, %s259
      %s276 = sphi 0, %s260
    $region4: #{tpu_custom_call.1} parent=1 // loop_header_branch
      %31 = sbr.rel (%p29) target = $region8
    $region5: #{tpu_custom_call.1} parent=1 // loop_body
      %s33 = ssub.s32 %s28, 1
      %s34 = ssub.s32 %s28, 2
      %s41 = sadd.s32 1, %s36
      %p42 = scmp.ge.s32.totalorder %s41, 16
      %s43 = scalar_select %p42, 0, %s41
      %s44 = sadd.s32 1, %s35
      %s45 = scalar_select %p42, %s44, %s35
      %p46 = scmp.ge.s32.totalorder %s45, 1
      %s47 = scalar_select %p46, 0, %s45
      %s48 = ssub.s32 %s36, %s43
      %s49 = ssub.s32 %s35, %s47
      %s50 = sor.u32 %s48, %s49
      %p51 = scmp.eq.s32.totalorder %s50, 0
      %s53 = sadd.s32 %s52, 1
      %s54 = scalar_select %p51, %s52, %s53
      %p57 = pneg %p51
      %p58 = scmp.eq.s32.totalorder %s28, 15
      %p59 = por %p57, %p58
      %p60 = scmp.ne.s32.totalorder %s52, %s55
      %p61 = scmp.eq.s32.totalorder %s28, 0
      %p62 = por %p60, %p61
      %p63 = scmp.ne.s32.totalorder %s52, %s55
      %p64 = scmp.eq.s32.totalorder %s33, 15
      %p65 = por %p63, %p64
      %p66 = scmp.ne.s32.totalorder %s55, %s56
      %p67 = scmp.eq.s32.totalorder %s33, 0
      %p68 = por %p66, %p67
      %p69 = scmp.ne.s32.totalorder %s55, %s56
      %p70 = scmp.eq.s32.totalorder %s34, 15
      %p71 = por %p69, %p70
      %p73 = scmp.ne.s32.totalorder %s56, %s72
      %p74 = scmp.eq.s32.totalorder %s34, 0
      %p75 = por %p73, %p74
      %s76 = ssub.s32 %s36, %s43
      %s77 = ssub.s32 %s35, %s47
      %s78 = sor.u32 %s76, %s77
      %p79 = scmp.eq.s32.totalorder %s78, 0
      %s81 = sadd.s32 %s80, 1
      %s82 = scalar_select %p79, %s80, %s81
      %p85 = pneg %p79
      %p86 = scmp.eq.s32.totalorder %s28, 15
      %p87 = por %p85, %p86
      %p88 = scmp.ne.s32.totalorder %s80, %s83
      %p89 = scmp.eq.s32.totalorder %s28, 0
      %p90 = por %p88, %p89
      %p91 = scmp.ne.s32.totalorder %s80, %s83
      %p92 = scmp.eq.s32.totalorder %s33, 15
      %p93 = por %p91, %p92
      %p94 = scmp.ne.s32.totalorder %s83, %s84
      %p95 = scmp.eq.s32.totalorder %s33, 0
      %p96 = por %p94, %p95
      %p97 = scmp.ne.s32.totalorder %s83, %s84
      %p98 = scmp.eq.s32.totalorder %s34, 15
      %p99 = por %p97, %p98
      %p101 = scmp.ne.s32.totalorder %s84, %s100
      %p102 = scmp.eq.s32.totalorder %s34, 0
      %p103 = por %p101, %p102
      %s104 = ssub.s32 %s35, %s47
      %p105 = scmp.eq.s32.totalorder %s104, 0
      %s107 = sadd.s32 %s106, 1
      %s108 = scalar_select %p105, %s106, %s107
      %p111 = pneg %p105
      %p112 = scmp.eq.s32.totalorder %s28, 15
      %p113 = por %p111, %p112
      %p114 = scmp.ne.s32.totalorder %s106, %s109
      %p115 = scmp.eq.s32.totalorder %s28, 0
      %p116 = por %p114, %p115
      %p117 = scmp.ne.s32.totalorder %s106, %s109
      %p118 = scmp.eq.s32.totalorder %s33, 15
      %p119 = por %p117, %p118
      %p120 = scmp.ne.s32.totalorder %s109, %s110
      %p121 = scmp.eq.s32.totalorder %s33, 0
      %p122 = por %p120, %p121
      %p123 = scmp.ne.s32.totalorder %s109, %s110
      %p124 = scmp.eq.s32.totalorder %s34, 15
      %p125 = por %p123, %p124
      %p127 = scmp.ne.s32.totalorder %s110, %s126
      %p128 = scmp.eq.s32.totalorder %s34, 0
      %p129 = por %p127, %p128
      %s130 = ssub.s32 %s35, %s47
      %p131 = scmp.eq.s32.totalorder %s130, 0
      %s133 = sadd.s32 %s132, 1
      %s134 = scalar_select %p131, %s132, %s133
      %p137 = pneg %p131
      %p138 = scmp.eq.s32.totalorder %s28, 15
      %p139 = por %p137, %p138
      %p140 = scmp.ne.s32.totalorder %s132, %s135
      %p141 = scmp.eq.s32.totalorder %s28, 0
      %p142 = por %p140, %p141
      %p143 = scmp.ne.s32.totalorder %s132, %s135
      %p144 = scmp.eq.s32.totalorder %s33, 15
      %p145 = por %p143, %p144
      %p146 = scmp.ne.s32.totalorder %s135, %s136
      %p147 = scmp.eq.s32.totalorder %s33, 0
      %p148 = por %p146, %p147
      %p149 = scmp.ne.s32.totalorder %s135, %s136
      %p150 = scmp.eq.s32.totalorder %s34, 15
      %p151 = por %p149, %p150
      %p153 = scmp.ne.s32.totalorder %s136, %s152
      %p154 = scmp.eq.s32.totalorder %s34, 0
      %p155 = por %p153, %p154
      %s156 = ssub.s32 %s35, %s47
      %p157 = scmp.eq.s32.totalorder %s156, 0
      %s159 = sadd.s32 %s158, 1
      %s160 = scalar_select %p157, %s158, %s159
      %p163 = pneg %p157
      %p164 = scmp.eq.s32.totalorder %s28, 15
      %p165 = por %p163, %p164
      %p166 = scmp.ne.s32.totalorder %s158, %s161
      %p167 = scmp.eq.s32.totalorder %s28, 0
      %p168 = por %p166, %p167
      %p169 = scmp.ne.s32.totalorder %s158, %s161
      %p170 = scmp.eq.s32.totalorder %s33, 15
      %p171 = por %p169, %p170
      %p172 = scmp.ne.s32.totalorder %s161, %s162
      %p173 = scmp.eq.s32.totalorder %s33, 0
      %p174 = por %p172, %p173
      %p175 = scmp.ne.s32.totalorder %s161, %s162
      %p176 = scmp.eq.s32.totalorder %s34, 15
      %p177 = por %p175, %p176
      %p179 = scmp.ne.s32.totalorder %s162, %s178
      %p180 = scmp.eq.s32.totalorder %s34, 0
      %p181 = por %p179, %p180
      %s183 = sadd.s32 %s182, 1
      %p186 = scmp.eq.s32.totalorder %s28, 15
      %p187 = scmp.ne.s32.totalorder %s182, %s184
      %p188 = scmp.eq.s32.totalorder %s28, 0
      %p189 = por %p187, %p188
      %p190 = scmp.ne.s32.totalorder %s182, %s184
      %p191 = scmp.eq.s32.totalorder %s33, 15
      %p192 = por %p190, %p191
      %p193 = scmp.ne.s32.totalorder %s184, %s185
      %p194 = scmp.eq.s32.totalorder %s33, 0
      %p195 = por %p193, %p194
      %p196 = scmp.ne.s32.totalorder %s184, %s185
      %p197 = scmp.eq.s32.totalorder %s34, 15
      %p198 = por %p196, %p197
      %p200 = scmp.ne.s32.totalorder %s185, %s199
      %p201 = scmp.eq.s32.totalorder %s34, 0
      %p202 = por %p200, %p201
      %s204 = sadd.s32 %s203, 1
      %p207 = scmp.eq.s32.totalorder %s28, 15
      %p208 = scmp.ne.s32.totalorder %s203, %s205
      %p209 = scmp.eq.s32.totalorder %s28, 0
      %p210 = por %p208, %p209
      %p211 = scmp.ne.s32.totalorder %s203, %s205
      %p212 = scmp.eq.s32.totalorder %s33, 15
      %p213 = por %p211, %p212
      %p214 = scmp.ne.s32.totalorder %s205, %s206
      %p215 = scmp.eq.s32.totalorder %s33, 0
      %p216 = por %p214, %p215
      %p217 = scmp.ne.s32.totalorder %s205, %s206
      %p218 = scmp.eq.s32.totalorder %s34, 15
      %p219 = por %p217, %p218
      %p221 = scmp.ne.s32.totalorder %s206, %s220
      %p222 = scmp.eq.s32.totalorder %s34, 0
      %p223 = por %p221, %p222
      %s224 = ssub.s32 %s36, %s43
      %s225 = ssub.s32 %s35, %s47
      %s226 = sor.u32 %s224, %s225
      %p227 = scmp.eq.s32.totalorder %s226, 0
      %s229 = sadd.s32 %s228, 1
      %s230 = scalar_select %p227, %s228, %s229
      %p233 = pneg %p227
      %p234 = scmp.eq.s32.totalorder %s28, 15
      %p235 = por %p233, %p234
      %p236 = scmp.ne.s32.totalorder %s228, %s231
      %p237 = scmp.eq.s32.totalorder %s28, 0
      %p238 = por %p236, %p237
      %p239 = scmp.ne.s32.totalorder %s228, %s231
      %p240 = scmp.eq.s32.totalorder %s33, 15
      %p241 = por %p239, %p240
      %p242 = scmp.ne.s32.totalorder %s231, %s232
      %p243 = scmp.eq.s32.totalorder %s33, 0
      %p244 = por %p242, %p243
      %p245 = scmp.ne.s32.totalorder %s231, %s232
      %p246 = scmp.eq.s32.totalorder %s34, 15
      %p247 = por %p245, %p246
      %p249 = scmp.ne.s32.totalorder %s232, %s248
      %p250 = scmp.eq.s32.totalorder %s34, 0
      %p251 = por %p249, %p250
      %s252 = ssub.s32 %s36, %s43
      %s253 = ssub.s32 %s35, %s47
      %s254 = sor.u32 %s252, %s253
      %p255 = scmp.eq.s32.totalorder %s254, 0
      %s257 = sadd.s32 %s256, 1
      %s258 = scalar_select %p255, %s256, %s257
      %p261 = pneg %p255
      %p262 = scmp.eq.s32.totalorder %s28, 15
      %p263 = por %p261, %p262
      %p264 = scmp.ne.s32.totalorder %s256, %s259
      %p265 = scmp.eq.s32.totalorder %s28, 0
      %p266 = por %p264, %p265
      %p267 = scmp.ne.s32.totalorder %s256, %s259
      %p268 = scmp.eq.s32.totalorder %s33, 15
      %p269 = por %p267, %p268
      %p270 = scmp.ne.s32.totalorder %s259, %s260
      %p271 = scmp.eq.s32.totalorder %s33, 0
      %p272 = por %p270, %p271
      %p273 = scmp.ne.s32.totalorder %s259, %s260
      %p274 = scmp.eq.s32.totalorder %s34, 15
      %p275 = por %p273, %p274
      %p277 = scmp.ne.s32.totalorder %s260, %s276
      %p278 = scmp.eq.s32.totalorder %s34, 0
      %p279 = por %p277, %p278
      %p280 = scmp.le.s32.totalorder 1, %s28
      %p281 = scmp.lt.s32.totalorder %s28, 17
      %p282 = pnand %p280, %p281
      %p283 = pneg %p282
      // Predicated region
      $region9: #{tpu_custom_call.1} parent=5 // pred_check
        _
      $region10: #{tpu_custom_call.1} parent=5 // pred_check_branch
        %285 = sbr.rel (%p282) target = $region12
      $region11: #{tpu_custom_call.1} parent=5 // pred_region
        %s286 = ssub.s32 %s28, 1
        // Predicated region
        $region13: #{tpu_custom_call.1} parent=11 // pred_check
          %p287 = pneg %p122
        $region14: #{tpu_custom_call.1} parent=11 // pred_check_branch
          %289 = sbr.rel (%p287) target = $region16
        $region15: #{tpu_custom_call.1} parent=11 // pred_region
          %s291 = ssub.s32 128, 128
          %292 = vsyncadd [#allocation6], %s291
          %s293 = smul.addr %s37, 128
          %s294 = scalar_lea.hbm %s2, %s293
          %s296 = sshll.u32 [#allocation7], 4
          %s297 = int_to_ptr.vmem [resolvable:$true] %s296
          %299 = dma.hbm_to_vmem [thread:$0]  %s294, 128, %s297, [#allocation6]
        $region16: #{tpu_custom_call.1} parent=11 // pred_fallthru
          _
        // Predicated region
        $region17: #{tpu_custom_call.1} parent=11 // pred_check
          %p300 = pneg %p148
        $region18: #{tpu_custom_call.1} parent=11 // pred_check_branch
          %302 = sbr.rel (%p300) target = $region20
        $region19: #{tpu_custom_call.1} parent=11 // pred_region
          %p303 = scmp.lt.s32.totalorder %s37, 0
          %s304 = scalar_select %p303, %s37, 0
          %s305 = smul.addr %s304, 8
          %s306 = scalar_lea.vmem %s3, %s305
        $region20: #{tpu_custom_call.1} parent=11 // pred_fallthru
          _
        // Predicated region
        $region21: #{tpu_custom_call.1} parent=11 // pred_check
          %p307 = pneg %p174
        $region22: #{tpu_custom_call.1} parent=11 // pred_check_branch
          %309 = sbr.rel (%p307) target = $region24
        $region23: #{tpu_custom_call.1} parent=11 // pred_region
          %s311 = ssub.s32 128, 128
          %312 = vsyncadd [#allocation9], %s311
          %s313 = smul.addr %s37, 128
          %s314 = scalar_lea.hbm %s4, %s313
          %s316 = sshll.u32 [#allocation8], 4
          %s317 = int_to_ptr.vmem [resolvable:$true] %s316
          %319 = dma.hbm_to_vmem [thread:$0]  %s314, 128, %s317, [#allocation9]
        $region24: #{tpu_custom_call.1} parent=11 // pred_fallthru
          _
        // Predicated region
        $region25: #{tpu_custom_call.1} parent=11 // pred_check
          %p320 = pneg %p195
        $region26: #{tpu_custom_call.1} parent=11 // pred_check_branch
          %322 = sbr.rel (%p320) target = $region28
        $region27: #{tpu_custom_call.1} parent=11 // pred_region
          _
        $region28: #{tpu_custom_call.1} parent=11 // pred_fallthru
          _
        // Predicated region
        $region29: #{tpu_custom_call.1} parent=11 // pred_check
          %p323 = pneg %p216
        $region30: #{tpu_custom_call.1} parent=11 // pred_check_branch
          %325 = sbr.rel (%p323) target = $region32
        $region31: #{tpu_custom_call.1} parent=11 // pred_region
          _
        $region32: #{tpu_custom_call.1} parent=11 // pred_fallthru
          _
      $region12: #{tpu_custom_call.1} parent=5 // pred_fallthru
        _
      %p326 = scmp.lt.s32.totalorder %s28, 16
      // Predicated region
      $region33: #{tpu_custom_call.1} parent=5 // pred_check
        %p327 = pneg %p326
      $region34: #{tpu_custom_call.1} parent=5 // pred_check_branch
        %329 = sbr.rel (%p327) target = $region36
      $region35: #{tpu_custom_call.1} parent=5 // pred_region
        // Predicated region
        $region37: #{tpu_custom_call.1} parent=35 // pred_check
          %p330 = pneg %p62
        $region38: #{tpu_custom_call.1} parent=35 // pred_check_branch
          %332 = sbr.rel (%p330) target = $region40
        $region39: #{tpu_custom_call.1} parent=35 // pred_region
          %s333 = sand.u32 %s52, 1
          %s334 = scalar_lea.sflag [#allocation3], %s333
          %s335 = sand.u32 %s52, 1
          %s336 = smul.addr %s335, 8
          %s337 = scalar_lea.vmem [#allocation2], %s336
          %s339 = ssub.s32 128, 128
          %340 = vsyncadd %s334, %s339
          %s341 = sadd.s32 %s35, %s36
          %s342 = smul.addr %s341, 128
          %s343 = scalar_lea.hbm %s0, %s342
          %s345 = sshll.u32 %s337, 4
          %s346 = int_to_ptr.vmem [resolvable:$true] %s345
          %348 = dma.hbm_to_vmem [thread:$0]  %s343, 128, %s346, %s334
        $region40: #{tpu_custom_call.1} parent=35 // pred_fallthru
          _
        // Predicated region
        $region41: #{tpu_custom_call.1} parent=35 // pred_check
          %p349 = pneg %p90
        $region42: #{tpu_custom_call.1} parent=35 // pred_check_branch
          %351 = sbr.rel (%p349) target = $region44
        $region43: #{tpu_custom_call.1} parent=35 // pred_region
          %s352 = sand.u32 %s28, 1
          %s353 = scalar_lea.sflag [#allocation6], %s352
          %s354 = sand.u32 %s80, 1
          %s355 = smul.addr %s354, 8
          %s356 = scalar_lea.vmem [#allocation5], %s355
          %s358 = ssub.s32 128, 128
          %359 = vsyncadd %s353, %s358
          %s360 = sadd.s32 %s35, %s36
          %s361 = smul.addr %s360, 128
          %s362 = scalar_lea.hbm %s1, %s361
          %s364 = sshll.u32 %s356, 4
          %s365 = int_to_ptr.vmem [resolvable:$true] %s364
          %367 = dma.hbm_to_vmem [thread:$0]  %s362, 128, %s365, %s353
        $region44: #{tpu_custom_call.1} parent=35 // pred_fallthru
          _
      $region36: #{tpu_custom_call.1} parent=5 // pred_fallthru
        _
      %p368 = scmp.le.s32.totalorder 1, %s28
      %p369 = scmp.lt.s32.totalorder %s28, 17
      %p370 = pnand %p368, %p369
      %p371 = pneg %p370
      // Predicated region
      $region45: #{tpu_custom_call.1} parent=5 // pred_check
        _
      $region46: #{tpu_custom_call.1} parent=5 // pred_check_branch
        %373 = sbr.rel (%p370) target = $region48
      $region47: #{tpu_custom_call.1} parent=5 // pred_region
        %s374 = ssub.s32 %s28, 1
        %s375 = sand.u32 %s55, 1
        %s376 = scalar_lea.sflag [#allocation3], %s375
        %s377 = sand.u32 %s55, 1
        %s378 = smul.addr %s377, 8
        %s379 = scalar_lea.vmem [#allocation2], %s378
        // Predicated region
        $region49: #{tpu_custom_call.1} parent=47 // pred_check
          %p380 = pneg %p68
        $region50: #{tpu_custom_call.1} parent=47 // pred_check_branch
          %382 = sbr.rel (%p380) target = $region52
        $region51: #{tpu_custom_call.1} parent=47 // pred_region
          %383 = dma.done %s376, 128
        $region52: #{tpu_custom_call.1} parent=47 // pred_fallthru
          _
        %s384 = sand.u32 %s33, 1
        %s385 = scalar_lea.sflag [#allocation6], %s384
        %s386 = sand.u32 %s83, 1
        %s387 = smul.addr %s386, 8
        %s388 = scalar_lea.vmem [#allocation5], %s387
        // Predicated region
        $region53: #{tpu_custom_call.1} parent=47 // pred_check
          %p389 = pneg %p96
        $region54: #{tpu_custom_call.1} parent=47 // pred_check_branch
          %391 = sbr.rel (%p389) target = $region56
        $region55: #{tpu_custom_call.1} parent=47 // pred_region
          %392 = dma.done %s385, 128
        $region56: #{tpu_custom_call.1} parent=47 // pred_fallthru
          _
        // Predicated region
        $region57: #{tpu_custom_call.1} parent=47 // pred_check
          %p393 = pneg %p122
        $region58: #{tpu_custom_call.1} parent=47 // pred_check_branch
          %395 = sbr.rel (%p393) target = $region60
        $region59: #{tpu_custom_call.1} parent=47 // pred_region
          %396 = dma.done [#allocation6], 128
        $region60: #{tpu_custom_call.1} parent=47 // pred_fallthru
          _
        // Predicated region
        $region61: #{tpu_custom_call.1} parent=47 // pred_check
          %p397 = pneg %p174
        $region62: #{tpu_custom_call.1} parent=47 // pred_check_branch
          %399 = sbr.rel (%p397) target = $region64
        $region63: #{tpu_custom_call.1} parent=47 // pred_region
          %400 = dma.done [#allocation9], 128
        $region64: #{tpu_custom_call.1} parent=47 // pred_fallthru
          _
        %s401 = sand.u32 %s55, 1
        %s402 = scalar_lea.sflag [#allocation3], %s401
        %s403 = sand.u32 %s55, 1
        %s404 = smul.addr %s403, 8
        %s405 = scalar_lea.vmem [#allocation2], %s404
        %p406 = pneg %p68
        %p407 = pneg %p65
        %s408 = sand.u32 %s33, 1
        %s409 = scalar_lea.sflag [#allocation6], %s408
        %s410 = sand.u32 %s83, 1
        %s411 = smul.addr %s410, 8
        %s412 = scalar_lea.vmem [#allocation5], %s411
        %p413 = pneg %p96
        %p414 = pneg %p93
        %p415 = pneg %p122
        %p416 = pneg %p119
        %p417 = scmp.lt.s32.totalorder %s37, 0
        %s418 = scalar_select %p417, %s37, 0
        %s419 = smul.addr %s418, 8
        %s420 = scalar_lea.vmem %s3, %s419
        %p421 = pneg %p148
        %p422 = pneg %p145
        %p423 = pneg %p174
        %p424 = pneg %p171
        %p425 = pneg %p195
        %p426 = pneg %p192
        %p427 = pneg %p216
        %p428 = pneg %p213
        %p429 = pneg %p244
        %p430 = pneg %p241
        %s431 = sand.u32 %s231, 1
        %s432 = scalar_lea.sflag [#allocation4], %s431
        %s433 = sand.u32 %s231, 1
        %s434 = smul.addr %s433, 8
        %s435 = scalar_lea.vmem [#allocation10], %s434
        %p436 = pneg %p272
        %p437 = pneg %p269
        %s438 = sand.u32 %s259, 1
        %s439 = scalar_lea.sflag [#allocation12], %s438
        %s440 = sand.u32 %s259, 1
        %s441 = smul.addr %s440, 8
        %s442 = scalar_lea.vmem [#allocation11], %s441
        %p443 = scmp.lt.s32.totalorder %s37, 0
        %s444 = scalar_select %p443, %s37, 0
        %s445 = smul.addr %s444, 8
        %s446 = scalar_lea.vmem %s3, %s445
        %v447 = vld [vmem:[#allocation7] sm:$0xff]
        %v448 = vld [vmem:[%s446] sm:$0xff]
        %v449 = vld [vmem:[#allocation8] sm:$0xff]
        %v450 = vld [vmem:[%s5] sm:$0x1]
        %v451 = vld [vmem:[%s6] sm:$0x1]
        %v452 = vld [vmem:[%s379] sm:$0xff]
        %454 = vrot.lane.b32.xlu0 %v452, 96
        %v455 = vpop.permute.xlu0 %454
        %457 = vrot.lane.b32.xlu0 %v452, 64
        %v458 = vpop.permute.xlu0 %457
        %460 = vrot.lane.b32.xlu0 %v452, 32
        %v461 = vpop.permute.xlu0 %460
        %v463 = vcombine.low %v452, %v458
        %v464 = vcombine.high %v452, %v458
        %v466 = vunpack.c.l.s4 1983009808
        %v467 = vunpack.c.0.s8 %v466
        %v468 = vlaneseq
        %v469 = vshrl.u32 %v468, 7
        %v470 = vsub.s32 %v467, %v469
        %v471 = vrot.slane %v463, %v470
        %v473 = vunpack.c.l.s4 1983009808
        %v474 = vunpack.c.0.s8 %v473
        %v475 = vlaneseq
        %v476 = vshrl.u32 %v475, 7
        %v477 = vsub.s32 %v474, %v476
        %v478 = vrot.slane %v464, %v477
        %v479 = vcombine.low %v455, %v461
        %v480 = vcombine.high %v455, %v461
        %v482 = vunpack.c.l.s4 1983009808
        %v483 = vunpack.c.0.s8 %v482
        %v484 = vlaneseq
        %v485 = vshrl.u32 %v484, 7
        %v486 = vsub.s32 %v483, %v485
        %v487 = vrot.slane %v479, %v486
        %v489 = vunpack.c.l.s4 1983009808
        %v490 = vunpack.c.0.s8 %v489
        %v491 = vlaneseq
        %v492 = vshrl.u32 %v491, 7
        %v493 = vsub.s32 %v490, %v492
        %v494 = vrot.slane %v480, %v493
        %v495 = vcombine.low %v471, %v487
        %v496 = vcombine.high %v471, %v487
        %v498 = vunpack.c.l.s4 1934713408
        %v499 = vunpack.c.0.s8 %v498
        %v500 = vlaneseq
        %v501 = vshrl.u32 %v500, 7
        %v502 = vsub.s32 %v499, %v501
        %v503 = vrot.slane %v495, %v502
        %v505 = vunpack.c.l.s4 1934713408
        %v506 = vunpack.c.0.s8 %v505
        %v507 = vlaneseq
        %v508 = vshrl.u32 %v507, 7
        %v509 = vsub.s32 %v506, %v508
        %v510 = vrot.slane %v496, %v509
        %v511 = vcombine.low %v478, %v494
        %v512 = vcombine.high %v478, %v494
        %v514 = vunpack.c.l.s4 1934713408
        %v515 = vunpack.c.0.s8 %v514
        %v516 = vlaneseq
        %v517 = vshrl.u32 %v516, 7
        %v518 = vsub.s32 %v515, %v517
        %v519 = vrot.slane %v511, %v518
        %v521 = vunpack.c.l.s4 1934713408
        %v522 = vunpack.c.0.s8 %v521
        %v523 = vlaneseq
        %v524 = vshrl.u32 %v523, 7
        %v525 = vsub.s32 %v522, %v524
        %v526 = vrot.slane %v512, %v525
        %v527 = vcombine.high %v503, 0.0
        %v528 = vcombine.high %v510, 0.0
        %v529 = vcombine.high %v519, 0.0
        %v530 = vcombine.high %v526, 0.0
        %v531 = vmul.f32 %v503, %v503
        %v532 = vmul.f32 %v527, %v527
        %v533 = vmul.f32 %v510, %v510
        %v534 = vmul.f32 %v528, %v528
        %v535 = vmul.f32 %v519, %v519
        %v536 = vmul.f32 %v529, %v529
        %v537 = vmul.f32 %v526, %v526
        %v538 = vmul.f32 %v530, %v530
        %vm539 = vcmask 257024
        %v540 = vsel %vm539, %v531, 0.0
        %541 = vadd.xlane.f32.xlu0 %v540
        %v542 = vpop.xlane.xlu0 %541
        %v543 = vsel %vm539, %v532, 0.0
        %544 = vadd.xlane.f32.xlu0 %v543
        %v545 = vpop.xlane.xlu0 %544
        %v546 = vsel %vm539, %v533, 0.0
        %547 = vadd.xlane.f32.xlu0 %v546
        %v548 = vpop.xlane.xlu0 %547
        %v549 = vsel %vm539, %v534, 0.0
        %550 = vadd.xlane.f32.xlu0 %v549
        %v551 = vpop.xlane.xlu0 %550
        %v552 = vsel %vm539, %v535, 0.0
        %553 = vadd.xlane.f32.xlu0 %v552
        %v554 = vpop.xlane.xlu0 %553
        %v555 = vsel %vm539, %v536, 0.0
        %556 = vadd.xlane.f32.xlu0 %v555
        %v557 = vpop.xlane.xlu0 %556
        %v558 = vsel %vm539, %v537, 0.0
        %559 = vadd.xlane.f32.xlu0 %v558
        %v560 = vpop.xlane.xlu0 %559
        %v561 = vsel %vm539, %v538, 0.0
        %562 = vadd.xlane.f32.xlu0 %v561
        %v563 = vpop.xlane.xlu0 %562
        %v564 = vrcp.pop 32.0
        %v565 = vmul.f32 %v542, %v564
        %v566 = vmul.f32 %v545, %v564
        %v567 = vmul.f32 %v548, %v564
        %v568 = vmul.f32 %v551, %v564
        %v569 = vmul.f32 %v554, %v564
        %v570 = vmul.f32 %v557, %v564
        %v571 = vmul.f32 %v560, %v564
        %v572 = vmul.f32 %v563, %v564
        %v573 = vadd.f32 %v565, 1e-06
        %v574 = vadd.f32 %v566, 1e-06
        %v575 = vadd.f32 %v567, 1e-06
        %v576 = vadd.f32 %v568, 1e-06
        %v577 = vadd.f32 %v569, 1e-06
        %v578 = vadd.f32 %v570, 1e-06
        %v579 = vadd.f32 %v571, 1e-06
        %v580 = vadd.f32 %v572, 1e-06
        %v581 = vrsqrt.pop %v573
        %v582 = vrsqrt.pop %v574
        %v583 = vrsqrt.pop %v575
        %v584 = vrsqrt.pop %v576
        %v585 = vrsqrt.pop %v577
        %v586 = vrsqrt.pop %v578
        %v587 = vrsqrt.pop %v579
        %v588 = vrsqrt.pop %v580
        %v589 = vmul.f32 %v503, %v581
        %v590 = vmul.f32 %v527, %v582
        %v591 = vmul.f32 %v510, %v583
        %v592 = vmul.f32 %v528, %v584
        %v593 = vmul.f32 %v519, %v585
        %v594 = vmul.f32 %v529, %v586
        %v595 = vmul.f32 %v526, %v587
        %v596 = vmul.f32 %v530, %v588
        %v597 = vcombine.low %v589, %v591
        %v599 = vunpack.c.l.s4 1983009808
        %v600 = vunpack.c.0.s8 %v599
        %v601 = vlaneseq
        %v602 = vshrl.u32 %v601, 7
        %v603 = vsub.s32 %v600, %v602
        %v604 = vrot.slane %v597, %v603
        %v605 = vcombine.low %v590, %v592
        %v607 = vunpack.c.l.s4 1983009808
        %v608 = vunpack.c.0.s8 %v607
        %v609 = vlaneseq
        %v610 = vshrl.u32 %v609, 7
        %v611 = vsub.s32 %v608, %v610
        %v612 = vrot.slane %v605, %v611
        %v613 = vcombine.low %v593, %v595
        %v615 = vunpack.c.l.s4 1983009808
        %v616 = vunpack.c.0.s8 %v615
        %v617 = vlaneseq
        %v618 = vshrl.u32 %v617, 7
        %v619 = vsub.s32 %v616, %v618
        %v620 = vrot.slane %v613, %v619
        %v621 = vcombine.low %v594, %v596
        %v623 = vunpack.c.l.s4 1983009808
        %v624 = vunpack.c.0.s8 %v623
        %v625 = vlaneseq
        %v626 = vshrl.u32 %v625, 7
        %v627 = vsub.s32 %v624, %v626
        %v628 = vrot.slane %v621, %v627
        %v629 = vcombine.low %v604, %v612
        %v630 = vcombine.high %v604, %v612
        %v632 = vunpack.c.l.s4 1934713408
        %v633 = vunpack.c.0.s8 %v632
        %v634 = vlaneseq
        %v635 = vshrl.u32 %v634, 7
        %v636 = vsub.s32 %v633, %v635
        %v637 = vrot.slane %v629, %v636
        %v639 = vunpack.c.l.s4 1934713408
        %v640 = vunpack.c.0.s8 %v639
        %v641 = vlaneseq
        %v642 = vshrl.u32 %v641, 7
        %v643 = vsub.s32 %v640, %v642
        %v644 = vrot.slane %v630, %v643
        %v645 = vcombine.low %v620, %v628
        %v646 = vcombine.high %v620, %v628
        %v648 = vunpack.c.l.s4 1934713408
        %v649 = vunpack.c.0.s8 %v648
        %v650 = vlaneseq
        %v651 = vshrl.u32 %v650, 7
        %v652 = vsub.s32 %v649, %v651
        %v653 = vrot.slane %v645, %v652
        %v655 = vunpack.c.l.s4 1934713408
        %v656 = vunpack.c.0.s8 %v655
        %v657 = vlaneseq
        %v658 = vshrl.u32 %v657, 7
        %v659 = vsub.s32 %v656, %v658
        %v660 = vrot.slane %v646, %v659
        %v661 = vcombine.low %v637, %v653
        %v662 = vcombine.high %v637, %v653
        %v663 = vcombine.low %v644, %v660
        %v664 = vcombine.high %v644, %v660
        %666 = vrot.lane.b32.xlu0 %v662, 32
        %v667 = vpop.permute.xlu0 %666
        %670 = vrot.lane.b32.xlu0 %v663, 64
        %v671 = vpop.permute.xlu0 %670
        %674 = vrot.lane.b32.xlu0 %v664, 96
        %v675 = vpop.permute.xlu0 %674
        %vm677 = vcmask 261120
        %v678 = vsel %vm677, %v661, %v667
        %vm679 = vcmask 523264
        %v680 = vsel %vm679, %v678, %v671
        %vm681 = vcmask 785408
        %v682 = vsel %vm681, %v680, %v675
        %v684 = vlaneseq
        %v685 = vshrl.u32 %v684, 7
        %v686 = vsub.s32 0, %v685
        %v687 = vrot.slane %v450, %v686
        %v689 = vmul.f32 %v682, %v687
        %v690 = vmul.f32 %v447, %v689
        %691 = vrot.lane.b32.xlu0 %v689, 1
        %v692 = vpop.permute.xlu0 %691
        %v693 = vmul.f32 %v448, %v692
        %v694 = vadd.f32 %v690, %v693
        %695 = vrot.lane.b32.xlu0 %v689, 127
        %v696 = vpop.permute.xlu0 %695
        %v697 = vmul.f32 %v449, %v696
        %v698 = vadd.f32 %v694, %v697
        %699 = vst [vmem:[%s435] sm:$0xff] %v698
        %v700 = vld [vmem:[%s388] sm:$0xff]
        %702 = vrot.lane.b32.xlu0 %v700, 96
        %v703 = vpop.permute.xlu0 %702
        %705 = vrot.lane.b32.xlu0 %v700, 64
        %v706 = vpop.permute.xlu0 %705
        %708 = vrot.lane.b32.xlu0 %v700, 32
        %v709 = vpop.permute.xlu0 %708
        %v711 = vcombine.low %v700, %v706
        %v712 = vcombine.high %v700, %v706
        %v714 = vunpack.c.l.s4 1983009808
        %v715 = vunpack.c.0.s8 %v714
        %v716 = vlaneseq
        %v717 = vshrl.u32 %v716, 7
        %v718 = vsub.s32 %v715, %v717
        %v719 = vrot.slane %v711, %v718
        %v721 = vunpack.c.l.s4 1983009808
        %v722 = vunpack.c.0.s8 %v721
        %v723 = vlaneseq
        %v724 = vshrl.u32 %v723, 7
        %v725 = vsub.s32 %v722, %v724
        %v726 = vrot.slane %v712, %v725
        %v727 = vcombine.low %v703, %v709
        %v728 = vcombine.high %v703, %v709
        %v730 = vunpack.c.l.s4 1983009808
        %v731 = vunpack.c.0.s8 %v730
        %v732 = vlaneseq
        %v733 = vshrl.u32 %v732, 7
        %v734 = vsub.s32 %v731, %v733
        %v735 = vrot.slane %v727, %v734
        %v737 = vunpack.c.l.s4 1983009808
        %v738 = vunpack.c.0.s8 %v737
        %v739 = vlaneseq
        %v740 = vshrl.u32 %v739, 7
        %v741 = vsub.s32 %v738, %v740
        %v742 = vrot.slane %v728, %v741
        %v743 = vcombine.low %v719, %v735
        %v744 = vcombine.high %v719, %v735
        %v746 = vunpack.c.l.s4 1934713408
        %v747 = vunpack.c.0.s8 %v746
        %v748 = vlaneseq
        %v749 = vshrl.u32 %v748, 7
        %v750 = vsub.s32 %v747, %v749
        %v751 = vrot.slane %v743, %v750
        %v753 = vunpack.c.l.s4 1934713408
        %v754 = vunpack.c.0.s8 %v753
        %v755 = vlaneseq
        %v756 = vshrl.u32 %v755, 7
        %v757 = vsub.s32 %v754, %v756
        %v758 = vrot.slane %v744, %v757
        %v759 = vcombine.low %v726, %v742
        %v760 = vcombine.high %v726, %v742
        %v762 = vunpack.c.l.s4 1934713408
        %v763 = vunpack.c.0.s8 %v762
        %v764 = vlaneseq
        %v765 = vshrl.u32 %v764, 7
        %v766 = vsub.s32 %v763, %v765
        %v767 = vrot.slane %v759, %v766
        %v769 = vunpack.c.l.s4 1934713408
        %v770 = vunpack.c.0.s8 %v769
        %v771 = vlaneseq
        %v772 = vshrl.u32 %v771, 7
        %v773 = vsub.s32 %v770, %v772
        %v774 = vrot.slane %v760, %v773
        %v775 = vcombine.high %v751, 0.0
        %v776 = vcombine.high %v758, 0.0
        %v777 = vcombine.high %v767, 0.0
        %v778 = vcombine.high %v774, 0.0
        %v779 = vmul.f32 %v751, %v751
        %v780 = vmul.f32 %v775, %v775
        %v781 = vmul.f32 %v758, %v758
        %v782 = vmul.f32 %v776, %v776
        %v783 = vmul.f32 %v767, %v767
        %v784 = vmul.f32 %v777, %v777
        %v785 = vmul.f32 %v774, %v774
        %v786 = vmul.f32 %v778, %v778
        %v787 = vsel %vm539, %v779, 0.0
        %788 = vadd.xlane.f32.xlu0 %v787
        %v789 = vpop.xlane.xlu0 %788
        %v790 = vsel %vm539, %v780, 0.0
        %791 = vadd.xlane.f32.xlu0 %v790
        %v792 = vpop.xlane.xlu0 %791
        %v793 = vsel %vm539, %v781, 0.0
        %794 = vadd.xlane.f32.xlu0 %v793
        %v795 = vpop.xlane.xlu0 %794
        %v796 = vsel %vm539, %v782, 0.0
        %797 = vadd.xlane.f32.xlu0 %v796
        %v798 = vpop.xlane.xlu0 %797
        %v799 = vsel %vm539, %v783, 0.0
        %800 = vadd.xlane.f32.xlu0 %v799
        %v801 = vpop.xlane.xlu0 %800
        %v802 = vsel %vm539, %v784, 0.0
        %803 = vadd.xlane.f32.xlu0 %v802
        %v804 = vpop.xlane.xlu0 %803
        %v805 = vsel %vm539, %v785, 0.0
        %806 = vadd.xlane.f32.xlu0 %v805
        %v807 = vpop.xlane.xlu0 %806
        %v808 = vsel %vm539, %v786, 0.0
        %809 = vadd.xlane.f32.xlu0 %v808
        %v810 = vpop.xlane.xlu0 %809
        %v811 = vmul.f32 %v789, %v564
        %v812 = vmul.f32 %v792, %v564
        %v813 = vmul.f32 %v795, %v564
        %v814 = vmul.f32 %v798, %v564
        %v815 = vmul.f32 %v801, %v564
        %v816 = vmul.f32 %v804, %v564
        %v817 = vmul.f32 %v807, %v564
        %v818 = vmul.f32 %v810, %v564
        %v819 = vadd.f32 %v811, 1e-06
        %v820 = vadd.f32 %v812, 1e-06
        %v821 = vadd.f32 %v813, 1e-06
        %v822 = vadd.f32 %v814, 1e-06
        %v823 = vadd.f32 %v815, 1e-06
        %v824 = vadd.f32 %v816, 1e-06
        %v825 = vadd.f32 %v817, 1e-06
        %v826 = vadd.f32 %v818, 1e-06
        %v827 = vrsqrt.pop %v819
        %v828 = vrsqrt.pop %v820
        %v829 = vrsqrt.pop %v821
        %v830 = vrsqrt.pop %v822
        %v831 = vrsqrt.pop %v823
        %v832 = vrsqrt.pop %v824
        %v833 = vrsqrt.pop %v825
        %v834 = vrsqrt.pop %v826
        %v835 = vmul.f32 %v751, %v827
        %v836 = vmul.f32 %v775, %v828
        %v837 = vmul.f32 %v758, %v829
        %v838 = vmul.f32 %v776, %v830
        %v839 = vmul.f32 %v767, %v831
        %v840 = vmul.f32 %v777, %v832
        %v841 = vmul.f32 %v774, %v833
        %v842 = vmul.f32 %v778, %v834
        %v843 = vcombine.low %v835, %v837
        %v845 = vunpack.c.l.s4 1983009808
        %v846 = vunpack.c.0.s8 %v845
        %v847 = vlaneseq
        %v848 = vshrl.u32 %v847, 7
        %v849 = vsub.s32 %v846, %v848
        %v850 = vrot.slane %v843, %v849
        %v851 = vcombine.low %v836, %v838
        %v853 = vunpack.c.l.s4 1983009808
        %v854 = vunpack.c.0.s8 %v853
        %v855 = vlaneseq
        %v856 = vshrl.u32 %v855, 7
        %v857 = vsub.s32 %v854, %v856
        %v858 = vrot.slane %v851, %v857
        %v859 = vcombine.low %v839, %v841
        %v861 = vunpack.c.l.s4 1983009808
        %v862 = vunpack.c.0.s8 %v861
        %v863 = vlaneseq
        %v864 = vshrl.u32 %v863, 7
        %v865 = vsub.s32 %v862, %v864
        %v866 = vrot.slane %v859, %v865
        %v867 = vcombine.low %v840, %v842
        %v869 = vunpack.c.l.s4 1983009808
        %v870 = vunpack.c.0.s8 %v869
        %v871 = vlaneseq
        %v872 = vshrl.u32 %v871, 7
        %v873 = vsub.s32 %v870, %v872
        %v874 = vrot.slane %v867, %v873
        %v875 = vcombine.low %v850, %v858
        %v876 = vcombine.high %v850, %v858
        %v878 = vunpack.c.l.s4 1934713408
        %v879 = vunpack.c.0.s8 %v878
        %v880 = vlaneseq
        %v881 = vshrl.u32 %v880, 7
        %v882 = vsub.s32 %v879, %v881
        %v883 = vrot.slane %v875, %v882
        %v885 = vunpack.c.l.s4 1934713408
        %v886 = vunpack.c.0.s8 %v885
        %v887 = vlaneseq
        %v888 = vshrl.u32 %v887, 7
        %v889 = vsub.s32 %v886, %v888
        %v890 = vrot.slane %v876, %v889
        %v891 = vcombine.low %v866, %v874
        %v892 = vcombine.high %v866, %v874
        %v894 = vunpack.c.l.s4 1934713408
        %v895 = vunpack.c.0.s8 %v894
        %v896 = vlaneseq
        %v897 = vshrl.u32 %v896, 7
        %v898 = vsub.s32 %v895, %v897
        %v899 = vrot.slane %v891, %v898
        %v901 = vunpack.c.l.s4 1934713408
        %v902 = vunpack.c.0.s8 %v901
        %v903 = vlaneseq
        %v904 = vshrl.u32 %v903, 7
        %v905 = vsub.s32 %v902, %v904
        %v906 = vrot.slane %v892, %v905
        %v907 = vcombine.low %v883, %v899
        %v908 = vcombine.high %v883, %v899
        %v909 = vcombine.low %v890, %v906
        %v910 = vcombine.high %v890, %v906
        %912 = vrot.lane.b32.xlu0 %v908, 32
        %v913 = vpop.permute.xlu0 %912
        %916 = vrot.lane.b32.xlu0 %v909, 64
        %v917 = vpop.permute.xlu0 %916
        %920 = vrot.lane.b32.xlu0 %v910, 96
        %v921 = vpop.permute.xlu0 %920
        %v923 = vsel %vm677, %v907, %v913
        %v924 = vsel %vm679, %v923, %v917
        %v925 = vsel %vm681, %v924, %v921
        %v927 = vlaneseq
        %v928 = vshrl.u32 %v927, 7
        %v929 = vsub.s32 0, %v928
        %v930 = vrot.slane %v451, %v929
        %v932 = vmul.f32 %v925, %v930
        %v933 = vmul.f32 %v447, %v932
        %934 = vrot.lane.b32.xlu0 %v932, 1
        %v935 = vpop.permute.xlu0 %934
        %v936 = vmul.f32 %v448, %v935
        %v937 = vadd.f32 %v933, %v936
        %938 = vrot.lane.b32.xlu0 %v932, 127
        %v939 = vpop.permute.xlu0 %938
        %v940 = vmul.f32 %v449, %v939
        %v941 = vadd.f32 %v937, %v940
        %942 = vst [vmem:[%s442] sm:$0xff] %v941
        %s943 = sand.u32 %s231, 1
        %s944 = scalar_lea.sflag [#allocation4], %s943
        %s945 = sand.u32 %s231, 1
        %s946 = smul.addr %s945, 8
        %s947 = scalar_lea.vmem [#allocation10], %s946
        %s948 = sand.u32 %s259, 1
        %s949 = scalar_lea.sflag [#allocation12], %s948
        %s950 = sand.u32 %s259, 1
        %s951 = smul.addr %s950, 8
        %s952 = scalar_lea.vmem [#allocation11], %s951
        // Predicated region
        $region65: #{tpu_custom_call.1} parent=47 // pred_check
          %p953 = pneg %p241
        $region66: #{tpu_custom_call.1} parent=47 // pred_check_branch
          %955 = sbr.rel (%p953) target = $region68
        $region67: #{tpu_custom_call.1} parent=47 // pred_region
          %s957 = ssub.s32 128, 128
          %958 = vsyncadd %s944, %s957
          %s959 = sadd.s32 %s37, %s38
          %s960 = smul.addr %s959, 128
          %s961 = scalar_lea.hbm %s7, %s960
          %s963 = sshll.u32 %s947, 4
          %s964 = int_to_ptr.vmem [resolvable:$true] %s963
          %966 = dma.vmem_to_hbm [thread:$0]  %s964, 128, %s961, %s944
        $region68: #{tpu_custom_call.1} parent=47 // pred_fallthru
          _
        // Predicated region
        $region69: #{tpu_custom_call.1} parent=47 // pred_check
          %p967 = pneg %p269
        $region70: #{tpu_custom_call.1} parent=47 // pred_check_branch
          %969 = sbr.rel (%p967) target = $region72
        $region71: #{tpu_custom_call.1} parent=47 // pred_region
          %s971 = ssub.s32 128, 128
          %972 = vsyncadd %s949, %s971
          %s973 = sadd.s32 %s37, %s38
          %s974 = smul.addr %s973, 128
          %s975 = scalar_lea.hbm %s8, %s974
          %s977 = sshll.u32 %s952, 4
          %s978 = int_to_ptr.vmem [resolvable:$true] %s977
          %980 = dma.vmem_to_hbm [thread:$0]  %s978, 128, %s975, %s949
        $region72: #{tpu_custom_call.1} parent=47 // pred_fallthru
          _
      $region48: #{tpu_custom_call.1} parent=5 // pred_fallthru
        _
      %p981 = scmp.le.s32.totalorder 2, %s28
      // Predicated region
      $region73: #{tpu_custom_call.1} parent=5 // pred_check
        %p982 = pneg %p981
      $region74: #{tpu_custom_call.1} parent=5 // pred_check_branch
        %984 = sbr.rel (%p982) target = $region76
      $region75: #{tpu_custom_call.1} parent=5 // pred_region
        %s985 = ssub.s32 %s28, 2
        // Predicated region
        $region77: #{tpu_custom_call.1} parent=75 // pred_check
          %p986 = pneg %p247
        $region78: #{tpu_custom_call.1} parent=75 // pred_check_branch
          %988 = sbr.rel (%p986) target = $region80
        $region79: #{tpu_custom_call.1} parent=75 // pred_region
          %s989 = sand.u32 %s232, 1
          %s990 = scalar_lea.sflag [#allocation4], %s989
          %s991 = sand.u32 %s232, 1
          %s992 = smul.addr %s991, 8
          %s993 = scalar_lea.vmem [#allocation10], %s992
          %994 = dma.done %s990, 128
        $region80: #{tpu_custom_call.1} parent=75 // pred_fallthru
          _
        // Predicated region
        $region81: #{tpu_custom_call.1} parent=75 // pred_check
          %p995 = pneg %p275
        $region82: #{tpu_custom_call.1} parent=75 // pred_check_branch
          %997 = sbr.rel (%p995) target = $region84
        $region83: #{tpu_custom_call.1} parent=75 // pred_region
          %s998 = sand.u32 %s260, 1
          %s999 = scalar_lea.sflag [#allocation12], %s998
          %s1000 = sand.u32 %s260, 1
          %s1001 = smul.addr %s1000, 8
          %s1002 = scalar_lea.vmem [#allocation11], %s1001
          %1003 = dma.done %s999, 128
        $region84: #{tpu_custom_call.1} parent=75 // pred_fallthru
          _
      $region76: #{tpu_custom_call.1} parent=5 // pred_fallthru
        _
    $region6: #{tpu_custom_call.1} parent=1 // loop_footer
      %s32 = sadd.s32 1, %s28
    $region7: #{tpu_custom_call.1} parent=1 // loop_footer_branch
      %27 = sbr.rel target = $region3
    $region8: #{tpu_custom_call.1} parent=1 // loop_exit
      _
    %1004 = vsyncpa [#allocation3], 1
    %s1005 = scalar_lea.sflag [#allocation3], 1
    %1006 = vsyncpa %s1005, 1
    %1007 = vsyncpa [#allocation6], 1
    %s1008 = scalar_lea.sflag [#allocation6], 1
    %1009 = vsyncpa %s1008, 1
    %1010 = vsyncpa [#allocation9], 1
    %1011 = vsyncpa [#allocation4], 1
    %s1012 = scalar_lea.sflag [#allocation4], 1
    %1013 = vsyncpa %s1012, 1
    %1014 = vsyncpa [#allocation12], 1
    %s1015 = scalar_lea.sflag [#allocation12], 1
    %1016 = vsyncpa %s1015, 1

</llo_original>
